<compile_context>
chip_gen: v6e
topology: v6e:2x2x1
jax: 0.10.0
libtpu: 0.0.40
codegen_flags: <defaults>
</compile_context>

<pallas_src>
import jax
import jax.numpy as jnp
from jax.experimental import pallas as pl
from jax.experimental.pallas import tpu as pltpu


LANE = 128     # lane (last-dim) granularity
SUBLANE = 8    # sublane (second-to-last dim) granularity


def _round_up(x, m):
    return ((x + m - 1) // m) * m


def _pad2d(a, rows, cols):
    return jnp.pad(a, ((0, rows - a.shape[0]), (0, cols - a.shape[1])))


# ---------------------------------------------------------------------------
# Fused Pallas kernel: 3 x [ A_hat @ (h @ W) + b -> relu ] -> pool -> Linear
# ---------------------------------------------------------------------------
def _fused_gcn_kernel(a_ref, x_ref,
                      w1_ref, b1_ref, w2_ref, b2_ref, w3_ref, b3_ref,
                      p_ref, wl_ref, bl_ref, o_ref):
    a = a_ref[...]                                   # [Np, Np] bf16, stays resident

    def gcn_layer(h_bf16, w_ref, b_ref, apply_relu):
        # X @ W first (cheap F-dim contraction), then aggregate with A_hat.
        # bf16 MXU inputs, f32 accumulation; bias/relu on the f32 accumulator.
        xw = jnp.dot(h_bf16, w_ref[...], preferred_element_type=jnp.float32)
        out = jnp.dot(a, xw.astype(a.dtype), preferred_element_type=jnp.float32)
        out = out + b_ref[...]                       # (1, Hp) f32 broadcast
        if apply_relu:
            out = jnp.maximum(out, 0.0)
        return out                                   # f32 [Np, Hp]

    h = gcn_layer(x_ref[...], w1_ref, b1_ref, True)
    h = gcn_layer(h.astype(a.dtype), w2_ref, b2_ref, True)
    h = gcn_layer(h.astype(a.dtype), w3_ref, b3_ref, False)

    # global_mean_pool (as matmul with the pooling matrix) + final Linear.
    # F.dropout(p=0.5, training=False) is the identity in eval mode -> no-op.
    pooled = jnp.dot(p_ref[...], h.astype(p_ref.dtype),
                     preferred_element_type=jnp.float32)            # [Gp, Hp]
    logits = jnp.dot(pooled.astype(wl_ref.dtype), wl_ref[...],
                     preferred_element_type=jnp.float32)            # [Gp, Cp]
    o_ref[...] = (logits + bl_ref[...]).astype(o_ref.dtype)


def gcn_forward(params, x, a_hat, pool_mat):
    """Fused forward pass. Returns [num_graphs, num_classes] f32 logits."""
    n, f = x.shape
    g = pool_mat.shape[0]
    hidden = params["w1"].shape[1]
    classes = params["wl"].shape[1]

    # N shows up as a lane dim (last dim of A_hat and pool_mat) -> pad to 128.
    np_ = _round_up(max(n, SUBLANE), LANE)
    fp = _round_up(f, LANE)
    hp = _round_up(hidden, LANE)
    cp = _round_up(classes, LANE)
    gp = _round_up(g, SUBLANE)

    bf16 = jnp.bfloat16
    a_p = _pad2d(a_hat, np_, np_).astype(bf16)
    x_p = _pad2d(x, np_, fp).astype(bf16)
    p_p = _pad2d(pool_mat, gp, np_).astype(bf16)
    w1 = _pad2d(params["w1"], fp, hp).astype(bf16)
    w2 = _pad2d(params["w2"], hp, hp).astype(bf16)
    w3 = _pad2d(params["w3"], hp, hp).astype(bf16)
    wl = _pad2d(params["wl"], hp, cp).astype(bf16)
    b1 = jnp.pad(params["b1"], (0, hp - hidden)).reshape(1, hp).astype(jnp.float32)
    b2 = jnp.pad(params["b2"], (0, hp - hidden)).reshape(1, hp).astype(jnp.float32)
    b3 = jnp.pad(params["b3"], (0, hp - hidden)).reshape(1, hp).astype(jnp.float32)
    bl = jnp.pad(params["bl"], (0, cp - classes)).reshape(1, cp).astype(jnp.float32)

    def full(shape):
        return pl.BlockSpec(shape, lambda i: (0,) * len(shape))

    out = pl.pallas_call(
        _fused_gcn_kernel,
        out_shape=jax.ShapeDtypeStruct((gp, cp), jnp.float32),
        grid=(1,),
        in_specs=[full(a_p.shape), full(x_p.shape),
                  full(w1.shape), full(b1.shape),
                  full(w2.shape), full(b2.shape),
                  full(w3.shape), full(b3.shape),
                  full(p_p.shape), full(wl.shape), full(bl.shape)],
        out_specs=full((gp, cp)),
        compiler_params=pltpu.CompilerParams(
            dimension_semantics=("arbitrary",)),
    )(a_p, x_p, w1, b1, w2, b2, w3, b3, p_p, wl, bl)

    return out[:g, :classes]


# ---------------------------------------------------------------------------
# Glue (plain JAX): normalized adjacency, pooling matrix, parameter init
# ---------------------------------------------------------------------------
def build_normalized_adjacency(edge_index, num_nodes):
    """A_hat = D^-1/2 (A + I) D^-1/2, dense [N, N] float32."""
    src, dst = edge_index[0], edge_index[1]
    a = jnp.zeros((num_nodes, num_nodes), jnp.float32)
    # message flows src -> dst (aggregated at dst): A[dst, src] = 1
    a = a.at[dst, src].set(1.0)
    a = a + jnp.eye(num_nodes, dtype=jnp.float32)      # self loops
    deg = jnp.sum(a, axis=1)
    d_inv_sqrt = jnp.where(deg > 0, 1.0 / jnp.sqrt(deg), 0.0)
    return d_inv_sqrt[:, None] * a * d_inv_sqrt[None, :]


def build_pool_matrix(batch, num_graphs, num_nodes):
    one_hot = (batch[None, :] == jnp.arange(num_graphs)[:, None]).astype(jnp.float32)
    counts = jnp.maximum(jnp.sum(one_hot, axis=1, keepdims=True), 1.0)
    return one_hot / counts                              # [G, N]


def init_params(key, num_features, hidden, num_classes):
    ks = jax.random.split(key, 8)

    def glorot(k, fan_in, fan_out):
        lim = jnp.sqrt(6.0 / (fan_in + fan_out))
        return jax.random.uniform(k, (fan_in, fan_out), jnp.float32, -lim, lim)

    return {
        "w1": glorot(ks[0], num_features, hidden), "b1": jnp.zeros((hidden,), jnp.float32),
        "w2": glorot(ks[1], hidden, hidden),       "b2": jnp.zeros((hidden,), jnp.float32),
        "w3": glorot(ks[2], hidden, hidden),       "b3": jnp.zeros((hidden,), jnp.float32),
        "wl": glorot(ks[3], hidden, num_classes),
        "bl": jax.random.uniform(ks[4], (num_classes,), jnp.float32, -0.1, 0.1),
    }


# ---------------------------------------------------------------------------
if __name__ == "__main__":
    NUM_NODES = 16
    NUM_FEATURES = 4
    HIDDEN = 32
    NUM_CLASSES = 4
    NUM_GRAPHS = 2

    key = jax.random.PRNGKey(0)
    kx, kp = jax.random.split(key)

    # node features [N, F]
    x = jax.random.normal(kx, (NUM_NODES, NUM_FEATURES), jnp.float32)

    # two ring graphs of 8 nodes each (undirected -> both directions)
    edges = []
    for base in (0, 8):
        for i in range(8):
            a, b = base + i, base + (i + 1) % 8
            edges.append((a, b))
            edges.append((b, a))
    edge_index = jnp.array(edges, dtype=jnp.int32).T          # [2, E]
    batch = jnp.array([0] * 8 + [1] * 8, dtype=jnp.int32)     # [N]

    a_hat = build_normalized_adjacency(edge_index, NUM_NODES)
    pool_mat = build_pool_matrix(batch, NUM_GRAPHS, NUM_NODES)
    params = init_params(kp, NUM_FEATURES, HIDDEN, NUM_CLASSES)

    out = gcn_forward(params, x, a_hat, pool_mat)
    out = jax.block_until_ready(out)
    assert out.shape == (NUM_GRAPHS, NUM_CLASSES), out.shape
    assert bool(jnp.all(jnp.isfinite(out)))
    print("KERNEL_OK")
</pallas_src>

<mosaic_0001>
module attributes {stable_mosaic.version = 11 : i64} {
  func.func @_fused_gcn_kernel(%arg0: i32, %arg1: memref<128x128xbf16, #tpu.memory_space<vmem>>, %arg2: memref<128x128xbf16, #tpu.memory_space<vmem>>, %arg3: memref<128x128xbf16, #tpu.memory_space<vmem>>, %arg4: memref<1x128xf32, #tpu.memory_space<vmem>>, %arg5: memref<128x128xbf16, #tpu.memory_space<vmem>>, %arg6: memref<1x128xf32, #tpu.memory_space<vmem>>, %arg7: memref<128x128xbf16, #tpu.memory_space<vmem>>, %arg8: memref<1x128xf32, #tpu.memory_space<vmem>>, %arg9: memref<8x128xbf16, #tpu.memory_space<vmem>>, %arg10: memref<128x128xbf16, #tpu.memory_space<vmem>>, %arg11: memref<1x128xf32, #tpu.memory_space<vmem>>, %arg12: memref<8x128xf32, #tpu.memory_space<vmem>>) attributes {dimension_semantics = [#tpu.dimension_semantics<arbitrary>], iteration_bounds = array<i64: 1>, scalar_prefetch = 0 : i64, scratch_operands = 0 : i64, tpu.core_type = #tpu.core_type<tc>, window_params = [{pipeline_mode = #tpu.pipeline_mode<synchronous>, transform_indices = @transform_0, window_bounds = array<i64: 128, 128>}, {pipeline_mode = #tpu.pipeline_mode<synchronous>, transform_indices = @transform_1, window_bounds = array<i64: 128, 128>}, {pipeline_mode = #tpu.pipeline_mode<synchronous>, transform_indices = @transform_2, window_bounds = array<i64: 128, 128>}, {pipeline_mode = #tpu.pipeline_mode<synchronous>, transform_indices = @transform_3, window_bounds = array<i64: 1, 128>}, {pipeline_mode = #tpu.pipeline_mode<synchronous>, transform_indices = @transform_4, window_bounds = array<i64: 128, 128>}, {pipeline_mode = #tpu.pipeline_mode<synchronous>, transform_indices = @transform_5, window_bounds = array<i64: 1, 128>}, {pipeline_mode = #tpu.pipeline_mode<synchronous>, transform_indices = @transform_6, window_bounds = array<i64: 128, 128>}, {pipeline_mode = #tpu.pipeline_mode<synchronous>, transform_indices = @transform_7, window_bounds = array<i64: 1, 128>}, {pipeline_mode = #tpu.pipeline_mode<synchronous>, transform_indices = @transform_8, window_bounds = array<i64: 8, 128>}, {pipeline_mode = #tpu.pipeline_mode<synchronous>, transform_indices = @transform_9, window_bounds = array<i64: 128, 128>}, {pipeline_mode = #tpu.pipeline_mode<synchronous>, transform_indices = @transform_10, window_bounds = array<i64: 1, 128>}, {pipeline_mode = #tpu.pipeline_mode<synchronous>, transform_indices = @transform_11, window_bounds = array<i64: 8, 128>}]} {
    %c0 = arith.constant 0 : index
    %c0_0 = arith.constant 0 : index
    %0 = vector.load %arg1[%c0, %c0_0] : memref<128x128xbf16, #tpu.memory_space<vmem>>, vector<128x128xbf16>
    %c0_1 = arith.constant 0 : index
    %c0_2 = arith.constant 0 : index
    %1 = vector.load %arg2[%c0_1, %c0_2] : memref<128x128xbf16, #tpu.memory_space<vmem>>, vector<128x128xbf16>
    %c0_3 = arith.constant 0 : index
    %c0_4 = arith.constant 0 : index
    %2 = vector.load %arg3[%c0_3, %c0_4] : memref<128x128xbf16, #tpu.memory_space<vmem>>, vector<128x128xbf16>
    %cst = arith.constant dense<0.000000e+00> : vector<128x128xf32>
    %3 = tpu.matmul %1, %2, %cst {dimension_numbers = #tpu.dot_dimension_numbers<[1], [0], [0], [1], [0, 0, 1, 1], [], []>} : vector<128x128xbf16>, vector<128x128xbf16>, vector<128x128xf32> -> vector<128x128xf32>
    %4 = arith.truncf %3 : vector<128x128xf32> to vector<128x128xbf16>
    %cst_5 = arith.constant dense<0.000000e+00> : vector<128x128xf32>
    %5 = tpu.matmul %0, %4, %cst_5 {dimension_numbers = #tpu.dot_dimension_numbers<[1], [0], [0], [1], [0, 0, 1, 1], [], []>} : vector<128x128xbf16>, vector<128x128xbf16>, vector<128x128xf32> -> vector<128x128xf32>
    %c0_6 = arith.constant 0 : index
    %c0_7 = arith.constant 0 : index
    %6 = vector.load %arg4[%c0_6, %c0_7] : memref<1x128xf32, #tpu.memory_space<vmem>>, vector<1x128xf32>
    %7 = vector.broadcast %6 : vector<1x128xf32> to vector<128x128xf32>
    %8 = arith.addf %5, %7 : vector<128x128xf32>
    %cst_8 = arith.constant 0.000000e+00 : f32
    %9 = vector.broadcast %cst_8 : f32 to vector<128x128xf32>
    %10 = arith.maximumf %8, %9 : vector<128x128xf32>
    %11 = arith.truncf %10 : vector<128x128xf32> to vector<128x128xbf16>
    %c0_9 = arith.constant 0 : index
    %c0_10 = arith.constant 0 : index
    %12 = vector.load %arg5[%c0_9, %c0_10] : memref<128x128xbf16, #tpu.memory_space<vmem>>, vector<128x128xbf16>
    %cst_11 = arith.constant dense<0.000000e+00> : vector<128x128xf32>
    %13 = tpu.matmul %11, %12, %cst_11 {dimension_numbers = #tpu.dot_dimension_numbers<[1], [0], [0], [1], [0, 0, 1, 1], [], []>} : vector<128x128xbf16>, vector<128x128xbf16>, vector<128x128xf32> -> vector<128x128xf32>
    %14 = arith.truncf %13 : vector<128x128xf32> to vector<128x128xbf16>
    %cst_12 = arith.constant dense<0.000000e+00> : vector<128x128xf32>
    %15 = tpu.matmul %0, %14, %cst_12 {dimension_numbers = #tpu.dot_dimension_numbers<[1], [0], [0], [1], [0, 0, 1, 1], [], []>} : vector<128x128xbf16>, vector<128x128xbf16>, vector<128x128xf32> -> vector<128x128xf32>
    %c0_13 = arith.constant 0 : index
    %c0_14 = arith.constant 0 : index
    %16 = vector.load %arg6[%c0_13, %c0_14] : memref<1x128xf32, #tpu.memory_space<vmem>>, vector<1x128xf32>
    %17 = vector.broadcast %16 : vector<1x128xf32> to vector<128x128xf32>
    %18 = arith.addf %15, %17 : vector<128x128xf32>
    %cst_15 = arith.constant 0.000000e+00 : f32
    %19 = vector.broadcast %cst_15 : f32 to vector<128x128xf32>
    %20 = arith.maximumf %18, %19 : vector<128x128xf32>
    %21 = arith.truncf %20 : vector<128x128xf32> to vector<128x128xbf16>
    %c0_16 = arith.constant 0 : index
    %c0_17 = arith.constant 0 : index
    %22 = vector.load %arg7[%c0_16, %c0_17] : memref<128x128xbf16, #tpu.memory_space<vmem>>, vector<128x128xbf16>
    %cst_18 = arith.constant dense<0.000000e+00> : vector<128x128xf32>
    %23 = tpu.matmul %21, %22, %cst_18 {dimension_numbers = #tpu.dot_dimension_numbers<[1], [0], [0], [1], [0, 0, 1, 1], [], []>} : vector<128x128xbf16>, vector<128x128xbf16>, vector<128x128xf32> -> vector<128x128xf32>
    %24 = arith.truncf %23 : vector<128x128xf32> to vector<128x128xbf16>
    %cst_19 = arith.constant dense<0.000000e+00> : vector<128x128xf32>
    %25 = tpu.matmul %0, %24, %cst_19 {dimension_numbers = #tpu.dot_dimension_numbers<[1], [0], [0], [1], [0, 0, 1, 1], [], []>} : vector<128x128xbf16>, vector<128x128xbf16>, vector<128x128xf32> -> vector<128x128xf32>
    %c0_20 = arith.constant 0 : index
    %c0_21 = arith.constant 0 : index
    %26 = vector.load %arg8[%c0_20, %c0_21] : memref<1x128xf32, #tpu.memory_space<vmem>>, vector<1x128xf32>
    %27 = vector.broadcast %26 : vector<1x128xf32> to vector<128x128xf32>
    %28 = arith.addf %25, %27 : vector<128x128xf32>
    %c0_22 = arith.constant 0 : index
    %c0_23 = arith.constant 0 : index
    %29 = vector.load %arg9[%c0_22, %c0_23] : memref<8x128xbf16, #tpu.memory_space<vmem>>, vector<8x128xbf16>
    %30 = arith.truncf %28 : vector<128x128xf32> to vector<128x128xbf16>
    %cst_24 = arith.constant dense<0.000000e+00> : vector<8x128xf32>
    %31 = tpu.matmul %29, %30, %cst_24 {dimension_numbers = #tpu.dot_dimension_numbers<[1], [0], [0], [1], [0, 0, 1, 1], [], []>} : vector<8x128xbf16>, vector<128x128xbf16>, vector<8x128xf32> -> vector<8x128xf32>
    %32 = arith.truncf %31 : vector<8x128xf32> to vector<8x128xbf16>
    %c0_25 = arith.constant 0 : index
    %c0_26 = arith.constant 0 : index
    %33 = vector.load %arg10[%c0_25, %c0_26] : memref<128x128xbf16, #tpu.memory_space<vmem>>, vector<128x128xbf16>
    %cst_27 = arith.constant dense<0.000000e+00> : vector<8x128xf32>
    %34 = tpu.matmul %32, %33, %cst_27 {dimension_numbers = #tpu.dot_dimension_numbers<[1], [0], [0], [1], [0, 0, 1, 1], [], []>} : vector<8x128xbf16>, vector<128x128xbf16>, vector<8x128xf32> -> vector<8x128xf32>
    %c0_28 = arith.constant 0 : index
    %c0_29 = arith.constant 0 : index
    %35 = vector.load %arg11[%c0_28, %c0_29] : memref<1x128xf32, #tpu.memory_space<vmem>>, vector<1x128xf32>
    %36 = vector.broadcast %35 : vector<1x128xf32> to vector<8x128xf32>
    %37 = arith.addf %34, %36 : vector<8x128xf32>
    %c0_30 = arith.constant 0 : index
    %c0_31 = arith.constant 0 : index
    %38 = vector.load %arg12[%c0_30, %c0_31] : memref<8x128xf32, #tpu.memory_space<vmem>>, vector<8x128xf32>
    tpu.vector_store %arg12[%c0_30, %c0_31], %37 {strides = array<i32>} : memref<8x128xf32, #tpu.memory_space<vmem>>, vector<8x128xf32>,
    return
  }
  func.func @transform_0(%arg0: i32) -> (i32, i32) {
    %c0_i32 = arith.constant 0 : i32
    %c0_i32_0 = arith.constant 0 : i32
    %c0_i32_1 = arith.constant 0 : i32
    return %c0_i32, %c0_i32_0 : i32, i32
  }
  func.func @transform_1(%arg0: i32) -> (i32, i32) {
    %c0_i32 = arith.constant 0 : i32
    %c0_i32_0 = arith.constant 0 : i32
    %c0_i32_1 = arith.constant 0 : i32
    return %c0_i32, %c0_i32_0 : i32, i32
  }
  func.func @transform_2(%arg0: i32) -> (i32, i32) {
    %c0_i32 = arith.constant 0 : i32
    %c0_i32_0 = arith.constant 0 : i32
    %c0_i32_1 = arith.constant 0 : i32
    return %c0_i32, %c0_i32_0 : i32, i32
  }
  func.func @transform_3(%arg0: i32) -> (i32, i32) {
    %c0_i32 = arith.constant 0 : i32
    %c0_i32_0 = arith.constant 0 : i32
    %c0_i32_1 = arith.constant 0 : i32
    return %c0_i32, %c0_i32_0 : i32, i32
  }
  func.func @transform_4(%arg0: i32) -> (i32, i32) {
    %c0_i32 = arith.constant 0 : i32
    %c0_i32_0 = arith.constant 0 : i32
    %c0_i32_1 = arith.constant 0 : i32
    return %c0_i32, %c0_i32_0 : i32, i32
  }
  func.func @transform_5(%arg0: i32) -> (i32, i32) {
    %c0_i32 = arith.constant 0 : i32
    %c0_i32_0 = arith.constant 0 : i32
    %c0_i32_1 = arith.constant 0 : i32
    return %c0_i32, %c0_i32_0 : i32, i32
  }
  func.func @transform_6(%arg0: i32) -> (i32, i32) {
    %c0_i32 = arith.constant 0 : i32
    %c0_i32_0 = arith.constant 0 : i32
    %c0_i32_1 = arith.constant 0 : i32
    return %c0_i32, %c0_i32_0 : i32, i32
  }
  func.func @transform_7(%arg0: i32) -> (i32, i32) {
    %c0_i32 = arith.constant 0 : i32
    %c0_i32_0 = arith.constant 0 : i32
    %c0_i32_1 = arith.constant 0 : i32
    return %c0_i32, %c0_i32_0 : i32, i32
  }
  func.func @transform_8(%arg0: i32) -> (i32, i32) {
    %c0_i32 = arith.constant 0 : i32
    %c0_i32_0 = arith.constant 0 : i32
    %c0_i32_1 = arith.constant 0 : i32
    return %c0_i32, %c0_i32_0 : i32, i32
  }
  func.func @transform_9(%arg0: i32) -> (i32, i32) {
    %c0_i32 = arith.constant 0 : i32
    %c0_i32_0 = arith.constant 0 : i32
    %c0_i32_1 = arith.constant 0 : i32
    return %c0_i32, %c0_i32_0 : i32, i32
  }
  func.func @transform_10(%arg0: i32) -> (i32, i32) {
    %c0_i32 = arith.constant 0 : i32
    %c0_i32_0 = arith.constant 0 : i32
    %c0_i32_1 = arith.constant 0 : i32
    return %c0_i32, %c0_i32_0 : i32, i32
  }
  func.func @transform_11(%arg0: i32) -> (i32, i32) {
    %c0_i32 = arith.constant 0 : i32
    %c0_i32_0 = arith.constant 0 : i32
    %c0_i32_1 = arith.constant 0 : i32
    return %c0_i32, %c0_i32_0 : i32, i32
  }
}

</mosaic_0001>

<llo_original>
// kernel: tpu_custom_call.1
$region0: #{tpu_custom_call.1}
  #allocation0 [shape = 'u32[]', space=smem, size = 0x4, offset = 0x4, fixed_abs, tag = 'smem constant byte address 0x4 - core index']
  #allocation1 [shape = 'u32[144,128]{1,0:T(1,128)}', space=vmem, size = 0x12000, scoped, tag = 'internal scratch']
  %s0 = inlined_call_operand.hbm [shape: bf16[128,128], index: 0, kind: input, shape index: {}]
  %s1 = inlined_call_operand.hbm [shape: bf16[128,128], index: 1, kind: input, shape index: {}]
  %s2 = inlined_call_operand.hbm [shape: bf16[128,128], index: 2, kind: input, shape index: {}]
  %s3 = inlined_call_operand.vmem [shape: f32[1,128], index: 3, kind: input, shape index: {}]
  %s4 = inlined_call_operand.hbm [shape: bf16[128,128], index: 4, kind: input, shape index: {}]
  %s5 = inlined_call_operand.vmem [shape: f32[1,128], index: 5, kind: input, shape index: {}]
  %s6 = inlined_call_operand.hbm [shape: bf16[128,128], index: 6, kind: input, shape index: {}]
  %s7 = inlined_call_operand.vmem [shape: f32[1,128], index: 7, kind: input, shape index: {}]
  %s8 = inlined_call_operand.vmem [shape: bf16[8,128], index: 8, kind: input, shape index: {}]
  %s9 = inlined_call_operand.hbm [shape: bf16[128,128], index: 9, kind: input, shape index: {}]
  %s10 = inlined_call_operand.vmem [shape: f32[1,128], index: 10, kind: input, shape index: {}]
  %s11 = inlined_call_operand.hbm [shape: f32[8,128], index: 11, kind: output, shape index: {}]
  %s12 = sld [smem:[#allocation0]]
  $region78: #{tpu_custom_call.1} parent=0
    _
  %s14 = ssub.s32 1, %s12
  %s15 = scalar_select 0, %s14, %s12
  $region1: #{tpu_custom_call.1} parent=0
    #allocation2 [shape = 'u8[32768]{0}', space=vmem, size = 0x8000, scoped, tag = 'input window, operand 0, single buffered']
    #allocation3 [shape = 's32[1]{0}', space=sflag, size = 0x4, scoped, tag = 'scoped memory for tpu_custom_call.1']
    #allocation4 [shape = 's32[1]{0}', space=sflag, size = 0x4, scoped, tag = 'scoped memory for tpu_custom_call.1']
    #allocation5 [shape = 'u8[32768]{0}', space=vmem, size = 0x8000, scoped, tag = 'input window, operand 1, single buffered']
    #allocation6 [shape = 's32[1]{0}', space=sflag, size = 0x4, scoped, tag = 'scoped memory for tpu_custom_call.1']
    #allocation7 [shape = 'u8[32768]{0}', space=vmem, size = 0x8000, scoped, tag = 'input window, operand 2, single buffered']
    #allocation8 [shape = 'u8[32768]{0}', space=vmem, size = 0x8000, scoped, tag = 'input window, operand 4, single buffered']
    #allocation9 [shape = 's32[1]{0}', space=sflag, size = 0x4, scoped, tag = 'scoped memory for tpu_custom_call.1']
    #allocation10 [shape = 'u8[32768]{0}', space=vmem, size = 0x8000, scoped, tag = 'input window, operand 6, single buffered']
    #allocation11 [shape = 'u8[32768]{0}', space=vmem, size = 0x8000, scoped, tag = 'input window, operand 9, single buffered']
    #allocation12 [shape = 's32[1]{0}', space=sflag, size = 0x4, scoped, tag = 'scoped memory for tpu_custom_call.1']
    #allocation13 [shape = 'u8[4096]{0}', space=vmem, size = 0x1000, scoped, tag = 'output window, operand 0, single buffered']
    %16 = vsyncpa [#allocation3], 0
    %17 = vsyncpa [#allocation6], 0
    %18 = vsyncpa [#allocation9], 0
    %19 = vsyncpa [#allocation12], 0
    %20 = vsyncpa [#allocation4], 0
    // Predicated region
    $region2: #{tpu_custom_call.1} parent=1 // pred_check
      _
    $region3: #{tpu_custom_call.1} parent=1 // pred_check_branch
      %22 = sbr.rel (0) target = $region5
    $region4: #{tpu_custom_call.1} parent=1 // pred_region
      %s24 = ssub.s32 1024, 1024
      %25 = vsyncadd [#allocation3], %s24
      %s26 = sshll.u32 [#allocation2], 4
      %s27 = int_to_ptr.vmem [resolvable:$true] %s26
      %32 = dma.hbm_to_vmem [thread:$0]  %s0, 1024, %s27, [#allocation3], 64, 64, 4
    $region5: #{tpu_custom_call.1} parent=1 // pred_fallthru
      _
    // Predicated region
    $region6: #{tpu_custom_call.1} parent=1 // pred_check
      _
    $region7: #{tpu_custom_call.1} parent=1 // pred_check_branch
      %34 = sbr.rel (0) target = $region9
    $region8: #{tpu_custom_call.1} parent=1 // pred_region
      %s36 = ssub.s32 1024, 1024
      %37 = vsyncadd [#allocation6], %s36
      %s38 = sshll.u32 [#allocation5], 4
      %s39 = int_to_ptr.vmem [resolvable:$true] %s38
      %44 = dma.hbm_to_vmem [thread:$0]  %s1, 1024, %s39, [#allocation6], 64, 64, 4
    $region9: #{tpu_custom_call.1} parent=1 // pred_fallthru
      _
    // Predicated region
    $region10: #{tpu_custom_call.1} parent=1 // pred_check
      _
    $region11: #{tpu_custom_call.1} parent=1 // pred_check_branch
      %46 = sbr.rel (0) target = $region13
    $region12: #{tpu_custom_call.1} parent=1 // pred_region
      %s48 = ssub.s32 1024, 1024
      %49 = vsyncadd [#allocation6], %s48
      %s50 = sshll.u32 [#allocation7], 4
      %s51 = int_to_ptr.vmem [resolvable:$true] %s50
      %56 = dma.hbm_to_vmem [thread:$0]  %s2, 1024, %s51, [#allocation6], 64, 64, 4
    $region13: #{tpu_custom_call.1} parent=1 // pred_fallthru
      _
    // Predicated region
    $region14: #{tpu_custom_call.1} parent=1 // pred_check
      _
    $region15: #{tpu_custom_call.1} parent=1 // pred_check_branch
      %58 = sbr.rel (0) target = $region17
    $region16: #{tpu_custom_call.1} parent=1 // pred_region
      _
    $region17: #{tpu_custom_call.1} parent=1 // pred_fallthru
      _
    // Predicated region
    $region18: #{tpu_custom_call.1} parent=1 // pred_check
      _
    $region19: #{tpu_custom_call.1} parent=1 // pred_check_branch
      %60 = sbr.rel (0) target = $region21
    $region20: #{tpu_custom_call.1} parent=1 // pred_region
      %s62 = ssub.s32 1024, 1024
      %63 = vsyncadd [#allocation9], %s62
      %s64 = sshll.u32 [#allocation8], 4
      %s65 = int_to_ptr.vmem [resolvable:$true] %s64
      %70 = dma.hbm_to_vmem [thread:$0]  %s4, 1024, %s65, [#allocation9], 64, 64, 4
    $region21: #{tpu_custom_call.1} parent=1 // pred_fallthru
      _
    // Predicated region
    $region22: #{tpu_custom_call.1} parent=1 // pred_check
      _
    $region23: #{tpu_custom_call.1} parent=1 // pred_check_branch
      %72 = sbr.rel (0) target = $region25
    $region24: #{tpu_custom_call.1} parent=1 // pred_region
      _
    $region25: #{tpu_custom_call.1} parent=1 // pred_fallthru
      _
    // Predicated region
    $region26: #{tpu_custom_call.1} parent=1 // pred_check
      _
    $region27: #{tpu_custom_call.1} parent=1 // pred_check_branch
      %74 = sbr.rel (0) target = $region29
    $region28: #{tpu_custom_call.1} parent=1 // pred_region
      %s76 = ssub.s32 1024, 1024
      %77 = vsyncadd [#allocation9], %s76
      %s78 = sshll.u32 [#allocation10], 4
      %s79 = int_to_ptr.vmem [resolvable:$true] %s78
      %84 = dma.hbm_to_vmem [thread:$0]  %s6, 1024, %s79, [#allocation9], 64, 64, 4
    $region29: #{tpu_custom_call.1} parent=1 // pred_fallthru
      _
    // Predicated region
    $region30: #{tpu_custom_call.1} parent=1 // pred_check
      _
    $region31: #{tpu_custom_call.1} parent=1 // pred_check_branch
      %86 = sbr.rel (0) target = $region33
    $region32: #{tpu_custom_call.1} parent=1 // pred_region
      _
    $region33: #{tpu_custom_call.1} parent=1 // pred_fallthru
      _
    // Predicated region
    $region34: #{tpu_custom_call.1} parent=1 // pred_check
      _
    $region35: #{tpu_custom_call.1} parent=1 // pred_check_branch
      %88 = sbr.rel (0) target = $region37
    $region36: #{tpu_custom_call.1} parent=1 // pred_region
      _
    $region37: #{tpu_custom_call.1} parent=1 // pred_fallthru
      _
    // Predicated region
    $region38: #{tpu_custom_call.1} parent=1 // pred_check
      _
    $region39: #{tpu_custom_call.1} parent=1 // pred_check_branch
      %90 = sbr.rel (0) target = $region41
    $region40: #{tpu_custom_call.1} parent=1 // pred_region
      %s92 = ssub.s32 1024, 1024
      %93 = vsyncadd [#allocation12], %s92
      %s94 = sshll.u32 [#allocation11], 4
      %s95 = int_to_ptr.vmem [resolvable:$true] %s94
      %100 = dma.hbm_to_vmem [thread:$0]  %s9, 1024, %s95, [#allocation12], 64, 64, 4
    $region41: #{tpu_custom_call.1} parent=1 // pred_fallthru
      _
    // Predicated region
    $region42: #{tpu_custom_call.1} parent=1 // pred_check
      _
    $region43: #{tpu_custom_call.1} parent=1 // pred_check_branch
      %102 = sbr.rel (0) target = $region45
    $region44: #{tpu_custom_call.1} parent=1 // pred_region
      _
    $region45: #{tpu_custom_call.1} parent=1 // pred_fallthru
      _
    // Predicated region
    $region46: #{tpu_custom_call.1} parent=1 // pred_check
      _
    $region47: #{tpu_custom_call.1} parent=1 // pred_check_branch
      %104 = sbr.rel (0) target = $region49
    $region48: #{tpu_custom_call.1} parent=1 // pred_region
      %105 = dma.done [#allocation3], 1024
    $region49: #{tpu_custom_call.1} parent=1 // pred_fallthru
      _
    // Predicated region
    $region50: #{tpu_custom_call.1} parent=1 // pred_check
      _
    $region51: #{tpu_custom_call.1} parent=1 // pred_check_branch
      %107 = sbr.rel (0) target = $region53
    $region52: #{tpu_custom_call.1} parent=1 // pred_region
      %108 = dma.done [#allocation6], 1024
    $region53: #{tpu_custom_call.1} parent=1 // pred_fallthru
      _
    // Predicated region
    $region54: #{tpu_custom_call.1} parent=1 // pred_check
      _
    $region55: #{tpu_custom_call.1} parent=1 // pred_check_branch
      %110 = sbr.rel (0) target = $region57
    $region56: #{tpu_custom_call.1} parent=1 // pred_region
      %111 = dma.done [#allocation6], 1024
    $region57: #{tpu_custom_call.1} parent=1 // pred_fallthru
      _
    // Predicated region
    $region58: #{tpu_custom_call.1} parent=1 // pred_check
      _
    $region59: #{tpu_custom_call.1} parent=1 // pred_check_branch
      %113 = sbr.rel (0) target = $region61
    $region60: #{tpu_custom_call.1} parent=1 // pred_region
      %114 = dma.done [#allocation9], 1024
    $region61: #{tpu_custom_call.1} parent=1 // pred_fallthru
      _
    // Predicated region
    $region62: #{tpu_custom_call.1} parent=1 // pred_check
      _
    $region63: #{tpu_custom_call.1} parent=1 // pred_check_branch
      %116 = sbr.rel (0) target = $region65
    $region64: #{tpu_custom_call.1} parent=1 // pred_region
      %117 = dma.done [#allocation9], 1024
    $region65: #{tpu_custom_call.1} parent=1 // pred_fallthru
      _
    // Predicated region
    $region66: #{tpu_custom_call.1} parent=1 // pred_check
      _
    $region67: #{tpu_custom_call.1} parent=1 // pred_check_branch
      %119 = sbr.rel (0) target = $region69
    $region68: #{tpu_custom_call.1} parent=1 // pred_region
      %120 = dma.done [#allocation12], 1024
    $region69: #{tpu_custom_call.1} parent=1 // pred_fallthru
      _
    %v122 = vld [vmem:[#allocation2] sm:$0xf]
    %v123 = vld [vmem:[#allocation2 + $0x4] sm:$0xf]
    %v124 = vld [vmem:[#allocation2 + $0x8] sm:$0xf]
    %v125 = vld [vmem:[#allocation2 + $0xc] sm:$0xf]
    %v126 = vld [vmem:[#allocation2 + $0x10] sm:$0xf]
    %v127 = vld [vmem:[#allocation2 + $0x14] sm:$0xf]
    %v128 = vld [vmem:[#allocation2 + $0x18] sm:$0xf]
    %v129 = vld [vmem:[#allocation2 + $0x1c] sm:$0xf]
    %v130 = vld [vmem:[#allocation2 + $0x20] sm:$0xf]
    %v131 = vld [vmem:[#allocation2 + $0x24] sm:$0xf]
    %v132 = vld [vmem:[#allocation2 + $0x28] sm:$0xf]
    %v133 = vld [vmem:[#allocation2 + $0x2c] sm:$0xf]
    %v134 = vld [vmem:[#allocation2 + $0x30] sm:$0xf]
    %v135 = vld [vmem:[#allocation2 + $0x34] sm:$0xf]
    %v136 = vld [vmem:[#allocation2 + $0x38] sm:$0xf]
    %v137 = vld [vmem:[#allocation2 + $0x3c] sm:$0xf]
    %v138 = vld [vmem:[#allocation5] sm:$0xf]
    %v139 = vld [vmem:[#allocation5 + $0x4] sm:$0xf]
    %v140 = vld [vmem:[#allocation5 + $0x8] sm:$0xf]
    %v141 = vld [vmem:[#allocation5 + $0xc] sm:$0xf]
    %v142 = vld [vmem:[#allocation5 + $0x10] sm:$0xf]
    %v143 = vld [vmem:[#allocation5 + $0x14] sm:$0xf]
    %v144 = vld [vmem:[#allocation5 + $0x18] sm:$0xf]
    %v145 = vld [vmem:[#allocation5 + $0x1c] sm:$0xf]
    %v146 = vld [vmem:[#allocation5 + $0x20] sm:$0xf]
    %v147 = vld [vmem:[#allocation5 + $0x24] sm:$0xf]
    %v148 = vld [vmem:[#allocation5 + $0x28] sm:$0xf]
    %v149 = vld [vmem:[#allocation5 + $0x2c] sm:$0xf]
    %v150 = vld [vmem:[#allocation5 + $0x30] sm:$0xf]
    %v151 = vld [vmem:[#allocation5 + $0x34] sm:$0xf]
    %v152 = vld [vmem:[#allocation5 + $0x38] sm:$0xf]
    %v153 = vld [vmem:[#allocation5 + $0x3c] sm:$0xf]
    %v154 = vld [vmem:[#allocation7] sm:$0xf]
    %v155 = vld [vmem:[#allocation7 + $0x4] sm:$0xf]
    %v156 = vld [vmem:[#allocation7 + $0x8] sm:$0xf]
    %v157 = vld [vmem:[#allocation7 + $0xc] sm:$0xf]
    %v158 = vld [vmem:[#allocation7 + $0x10] sm:$0xf]
    %v159 = vld [vmem:[#allocation7 + $0x14] sm:$0xf]
    %v160 = vld [vmem:[#allocation7 + $0x18] sm:$0xf]
    %v161 = vld [vmem:[#allocation7 + $0x1c] sm:$0xf]
    %v162 = vld [vmem:[#allocation7 + $0x20] sm:$0xf]
    %v163 = vld [vmem:[#allocation7 + $0x24] sm:$0xf]
    %v164 = vld [vmem:[#allocation7 + $0x28] sm:$0xf]
    %v165 = vld [vmem:[#allocation7 + $0x2c] sm:$0xf]
    %v166 = vld [vmem:[#allocation7 + $0x30] sm:$0xf]
    %v167 = vld [vmem:[#allocation7 + $0x34] sm:$0xf]
    %v168 = vld [vmem:[#allocation7 + $0x38] sm:$0xf]
    %v169 = vld [vmem:[#allocation7 + $0x3c] sm:$0xf]
    %v186 = vunpack.c.l.b16 %v138
    %v187 = vunpack.c.l.b16 %v139
    %v188 = vunpack.c.l.b16 %v140
    %v189 = vunpack.c.l.b16 %v141
    %v190 = vunpack.c.l.b16 %v142
    %v191 = vunpack.c.l.b16 %v143
    %v192 = vunpack.c.l.b16 %v144
    %v193 = vunpack.c.l.b16 %v145
    %v194 = vunpack.c.l.b16 %v146
    %v195 = vunpack.c.l.b16 %v147
    %v196 = vunpack.c.l.b16 %v148
    %v197 = vunpack.c.l.b16 %v149
    %v198 = vunpack.c.l.b16 %v150
    %v199 = vunpack.c.l.b16 %v151
    %v200 = vunpack.c.l.b16 %v152
    %v201 = vunpack.c.l.b16 %v153
    %v202 = vpack.c.b16 %v187, %v186
    %v203 = vpack.c.b16 %v189, %v188
    %v204 = vpack.c.b16 %v191, %v190
    %v205 = vpack.c.b16 %v193, %v192
    %v206 = vpack.c.b16 %v195, %v194
    %v207 = vpack.c.b16 %v197, %v196
    %v208 = vpack.c.b16 %v199, %v198
    %v209 = vpack.c.b16 %v201, %v200
    %v234 = vunpack.c.l.b16 %v154
    %v235 = vunpack.c.l.b16 %v155
    %v236 = vunpack.c.l.b16 %v156
    %v237 = vunpack.c.l.b16 %v157
    %v238 = vunpack.c.l.b16 %v158
    %v239 = vunpack.c.l.b16 %v159
    %v240 = vunpack.c.l.b16 %v160
    %v241 = vunpack.c.l.b16 %v161
    %v242 = vunpack.c.l.b16 %v162
    %v243 = vunpack.c.l.b16 %v163
    %v244 = vunpack.c.l.b16 %v164
    %v245 = vunpack.c.l.b16 %v165
    %v246 = vunpack.c.l.b16 %v166
    %v247 = vunpack.c.l.b16 %v167
    %v248 = vunpack.c.l.b16 %v168
    %v249 = vunpack.c.l.b16 %v169
    %v250 = vpack.c.b16 %v235, %v234
    %v251 = vpack.c.b16 %v237, %v236
    %v252 = vpack.c.b16 %v239, %v238
    %v253 = vpack.c.b16 %v241, %v240
    %v254 = vpack.c.b16 %v243, %v242
    %v255 = vpack.c.b16 %v245, %v244
    %v256 = vpack.c.b16 %v247, %v246
    %v257 = vpack.c.b16 %v249, %v248
    %266 = vmatprep.subr.bf16.mxu0 0
    %267 = vmatpush1.bf16.msra.mxu0 %v257
    %268 = vmatprep.subr.bf16.mxu0 0
    %269 = vmatpush1.bf16.msra.mxu0 %v256
    %270 = vmatprep.subr.bf16.mxu0 0
    %271 = vmatpush1.bf16.msra.mxu0 %v255
    %272 = vmatprep.subr.bf16.mxu0 0
    %273 = vmatpush1.bf16.msra.mxu0 %v254
    %274 = vmatprep.subr.bf16.mxu0 0
    %275 = vmatpush1.bf16.msra.mxu0 %v253
    %276 = vmatprep.subr.bf16.mxu0 0
    %277 = vmatpush1.bf16.msra.mxu0 %v252
    %278 = vmatprep.subr.bf16.mxu0 0
    %279 = vmatpush1.bf16.msra.mxu0 %v251
    %280 = vmatprep.subr.bf16.mxu0 0
    %281 = vmatpush1.bf16.msra.mxu0 %v250
    %282 = vmatprep.subr.bf16.mxu0 0
    %283 = vmatpush2.bf16.msra.mxu0 0
    %284 = vmatprep.subr.bf16.mxu0 0
    %285 = vmatpush2.bf16.msra.mxu0 0
    %286 = vmatprep.subr.bf16.mxu0 0
    %287 = vmatpush2.bf16.msra.mxu0 0
    %288 = vmatprep.subr.bf16.mxu0 0
    %289 = vmatpush2.bf16.msra.mxu0 0
    %290 = vmatprep.subr.bf16.mxu0 0
    %291 = vmatpush2.bf16.msra.mxu0 0
    %292 = vmatprep.subr.bf16.mxu0 0
    %293 = vmatpush2.bf16.msra.mxu0 0
    %294 = vmatprep.subr.bf16.mxu0 0
    %295 = vmatpush2.bf16.msra.mxu0 0
    %296 = vmatprep.subr.bf16.mxu0 0
    %297 = vmatpush2.bf16.msra.mxu0 0
    %298 = vmatprep.mubr.bf16.mxu0 0
    %299 = vmatmul.mubr.bf16.gmra.mxu0 %v202
    %v300 = vpop.f32.mrf.mxu0
    %v301 = vadd.f32 0.0, %v300
    %v302 = vpop.f32.mrf.mxu0
    %v303 = vpop.f32.mrf.mxu0
    %v304 = vadd.f32 0.0, %v303
    %v305 = vpop.f32.mrf.mxu0
    %306 = vmatprep.mubr.bf16.mxu0 0
    %307 = vmatmul.mubr.bf16.gmra.mxu0 %v203
    %v308 = vpop.f32.mrf.mxu0
    %v309 = vadd.f32 0.0, %v308
    %v310 = vpop.f32.mrf.mxu0
    %v311 = vpop.f32.mrf.mxu0
    %v312 = vadd.f32 0.0, %v311
    %v313 = vpop.f32.mrf.mxu0
    %314 = vmatprep.mubr.bf16.mxu0 0
    %315 = vmatmul.mubr.bf16.gmra.mxu0 %v204
    %v316 = vpop.f32.mrf.mxu0
    %v317 = vadd.f32 0.0, %v316
    %v318 = vpop.f32.mrf.mxu0
    %v319 = vpop.f32.mrf.mxu0
    %v320 = vadd.f32 0.0, %v319
    %v321 = vpop.f32.mrf.mxu0
    %322 = vmatprep.mubr.bf16.mxu0 0
    %323 = vmatmul.mubr.bf16.gmra.mxu0 %v205
    %v324 = vpop.f32.mrf.mxu0
    %v325 = vadd.f32 0.0, %v324
    %v326 = vpop.f32.mrf.mxu0
    %v327 = vpop.f32.mrf.mxu0
    %v328 = vadd.f32 0.0, %v327
    %v329 = vpop.f32.mrf.mxu0
    %330 = vmatprep.mubr.bf16.mxu0 0
    %331 = vmatmul.mubr.bf16.gmra.mxu0 %v206
    %v332 = vpop.f32.mrf.mxu0
    %v333 = vadd.f32 0.0, %v332
    %v334 = vpop.f32.mrf.mxu0
    %v335 = vpop.f32.mrf.mxu0
    %v336 = vadd.f32 0.0, %v335
    %v337 = vpop.f32.mrf.mxu0
    %338 = vmatprep.mubr.bf16.mxu0 0
    %339 = vmatmul.mubr.bf16.gmra.mxu0 %v207
    %v340 = vpop.f32.mrf.mxu0
    %v341 = vadd.f32 0.0, %v340
    %v342 = vpop.f32.mrf.mxu0
    %v343 = vpop.f32.mrf.mxu0
    %v344 = vadd.f32 0.0, %v343
    %v345 = vpop.f32.mrf.mxu0
    %346 = vmatprep.mubr.bf16.mxu0 0
    %347 = vmatmul.mubr.bf16.gmra.mxu0 %v208
    %v348 = vpop.f32.mrf.mxu0
    %v349 = vadd.f32 0.0, %v348
    %v350 = vpop.f32.mrf.mxu0
    %v351 = vpop.f32.mrf.mxu0
    %v352 = vadd.f32 0.0, %v351
    %v353 = vpop.f32.mrf.mxu0
    %354 = vmatprep.mubr.bf16.mxu0 0
    %355 = vmatmul.mubr.bf16.gmra.mxu0 %v209
    %v356 = vpop.f32.mrf.mxu0
    %v357 = vadd.f32 0.0, %v356
    %v358 = vpop.f32.mrf.mxu0
    %v359 = vpop.f32.mrf.mxu0
    %v360 = vadd.f32 0.0, %v359
    %v361 = vpop.f32.mrf.mxu0
    %362 = vdwg.mxu0
    %v363 = vpack.c.bf16 %v304, %v301
    %v364 = vpack.c.bf16 %v312, %v309
    %v365 = vpack.c.bf16 %v320, %v317
    %v366 = vpack.c.bf16 %v328, %v325
    %v367 = vpack.c.bf16 %v336, %v333
    %v368 = vpack.c.bf16 %v344, %v341
    %v369 = vpack.c.bf16 %v352, %v349
    %v370 = vpack.c.bf16 %v360, %v357
    %v371 = vld [vmem:[%s3] sm:$0x1]
    %v373 = vlaneseq
    %v374 = vshrl.u32 %v373, 7
    %v375 = vsub.s32 0, %v374
    %v376 = vrot.slane %v371, %v375
    %v394 = vunpack.c.l.b16 %v122
    %v395 = vunpack.c.l.b16 %v123
    %v396 = vunpack.c.l.b16 %v124
    %v397 = vunpack.c.l.b16 %v125
    %v398 = vunpack.c.l.b16 %v126
    %v399 = vunpack.c.l.b16 %v127
    %v400 = vunpack.c.l.b16 %v128
    %v401 = vunpack.c.l.b16 %v129
    %v402 = vunpack.c.l.b16 %v130
    %v403 = vunpack.c.l.b16 %v131
    %v404 = vunpack.c.l.b16 %v132
    %v405 = vunpack.c.l.b16 %v133
    %v406 = vunpack.c.l.b16 %v134
    %v407 = vunpack.c.l.b16 %v135
    %v408 = vunpack.c.l.b16 %v136
    %v409 = vunpack.c.l.b16 %v137
    %v410 = vpack.c.b16 %v395, %v394
    %v411 = vpack.c.b16 %v397, %v396
    %v412 = vpack.c.b16 %v399, %v398
    %v413 = vpack.c.b16 %v401, %v400
    %v414 = vpack.c.b16 %v403, %v402
    %v415 = vpack.c.b16 %v405, %v404
    %v416 = vpack.c.b16 %v407, %v406
    %v417 = vpack.c.b16 %v409, %v408
    %426 = vmatprep.subr.bf16.mxu0 0
    %427 = vmatpush1.bf16.msra.mxu0 %v370
    %428 = vmatprep.subr.bf16.mxu0 0
    %429 = vmatpush1.bf16.msra.mxu0 %v369
    %430 = vmatprep.subr.bf16.mxu0 0
    %431 = vmatpush1.bf16.msra.mxu0 %v368
    %432 = vmatprep.subr.bf16.mxu0 0
    %433 = vmatpush1.bf16.msra.mxu0 %v367
    %434 = vmatprep.subr.bf16.mxu0 0
    %435 = vmatpush1.bf16.msra.mxu0 %v366
    %436 = vmatprep.subr.bf16.mxu0 0
    %437 = vmatpush1.bf16.msra.mxu0 %v365
    %438 = vmatprep.subr.bf16.mxu0 0
    %439 = vmatpush1.bf16.msra.mxu0 %v364
    %440 = vmatprep.subr.bf16.mxu0 0
    %441 = vmatpush1.bf16.msra.mxu0 %v363
    %442 = vmatprep.subr.bf16.mxu0 0
    %443 = vmatpush2.bf16.msra.mxu0 0
    %444 = vmatprep.subr.bf16.mxu0 0
    %445 = vmatpush2.bf16.msra.mxu0 0
    %446 = vmatprep.subr.bf16.mxu0 0
    %447 = vmatpush2.bf16.msra.mxu0 0
    %448 = vmatprep.subr.bf16.mxu0 0
    %449 = vmatpush2.bf16.msra.mxu0 0
    %450 = vmatprep.subr.bf16.mxu0 0
    %451 = vmatpush2.bf16.msra.mxu0 0
    %452 = vmatprep.subr.bf16.mxu0 0
    %453 = vmatpush2.bf16.msra.mxu0 0
    %454 = vmatprep.subr.bf16.mxu0 0
    %455 = vmatpush2.bf16.msra.mxu0 0
    %456 = vmatprep.subr.bf16.mxu0 0
    %457 = vmatpush2.bf16.msra.mxu0 0
    %458 = vmatprep.mubr.bf16.mxu0 0
    %459 = vmatmul.mubr.bf16.gmra.mxu0 %v410
    %v460 = vpop.f32.mrf.mxu0
    %v461 = vadd.f32 %v376, %v460
    %v462 = vpop.f32.mrf.mxu0
    %v463 = vpop.f32.mrf.mxu0
    %v464 = vadd.f32 %v376, %v463
    %v465 = vpop.f32.mrf.mxu0
    %466 = vmatprep.mubr.bf16.mxu0 0
    %467 = vmatmul.mubr.bf16.gmra.mxu0 %v411
    %v468 = vpop.f32.mrf.mxu0
    %v469 = vadd.f32 %v376, %v468
    %v470 = vpop.f32.mrf.mxu0
    %v471 = vpop.f32.mrf.mxu0
    %v472 = vadd.f32 %v376, %v471
    %v473 = vpop.f32.mrf.mxu0
    %474 = vmatprep.mubr.bf16.mxu0 0
    %475 = vmatmul.mubr.bf16.gmra.mxu0 %v412
    %v476 = vpop.f32.mrf.mxu0
    %v477 = vadd.f32 %v376, %v476
    %v478 = vpop.f32.mrf.mxu0
    %v479 = vpop.f32.mrf.mxu0
    %v480 = vadd.f32 %v376, %v479
    %v481 = vpop.f32.mrf.mxu0
    %482 = vmatprep.mubr.bf16.mxu0 0
    %483 = vmatmul.mubr.bf16.gmra.mxu0 %v413
    %v484 = vpop.f32.mrf.mxu0
    %v485 = vadd.f32 %v376, %v484
    %v486 = vpop.f32.mrf.mxu0
    %v487 = vpop.f32.mrf.mxu0
    %v488 = vadd.f32 %v376, %v487
    %v489 = vpop.f32.mrf.mxu0
    %490 = vmatprep.mubr.bf16.mxu0 0
    %491 = vmatmul.mubr.bf16.gmra.mxu0 %v414
    %v492 = vpop.f32.mrf.mxu0
    %v493 = vadd.f32 %v376, %v492
    %v494 = vpop.f32.mrf.mxu0
    %v495 = vpop.f32.mrf.mxu0
    %v496 = vadd.f32 %v376, %v495
    %v497 = vpop.f32.mrf.mxu0
    %498 = vmatprep.mubr.bf16.mxu0 0
    %499 = vmatmul.mubr.bf16.gmra.mxu0 %v415
    %v500 = vpop.f32.mrf.mxu0
    %v501 = vadd.f32 %v376, %v500
    %v502 = vpop.f32.mrf.mxu0
    %v503 = vpop.f32.mrf.mxu0
    %v504 = vadd.f32 %v376, %v503
    %v505 = vpop.f32.mrf.mxu0
    %506 = vmatprep.mubr.bf16.mxu0 0
    %507 = vmatmul.mubr.bf16.gmra.mxu0 %v416
    %v508 = vpop.f32.mrf.mxu0
    %v509 = vadd.f32 %v376, %v508
    %v510 = vpop.f32.mrf.mxu0
    %v511 = vpop.f32.mrf.mxu0
    %v512 = vadd.f32 %v376, %v511
    %v513 = vpop.f32.mrf.mxu0
    %514 = vmatprep.mubr.bf16.mxu0 0
    %515 = vmatmul.mubr.bf16.gmra.mxu0 %v417
    %v516 = vpop.f32.mrf.mxu0
    %v517 = vadd.f32 %v376, %v516
    %v518 = vpop.f32.mrf.mxu0
    %v519 = vpop.f32.mrf.mxu0
    %v520 = vadd.f32 %v376, %v519
    %v521 = vpop.f32.mrf.mxu0
    %522 = vdwg.mxu0
    %v523 = vmax.f32 %v461, 0.0
    %v524 = vmax.f32 %v464, 0.0
    %v525 = vmax.f32 %v469, 0.0
    %v526 = vmax.f32 %v472, 0.0
    %v527 = vmax.f32 %v477, 0.0
    %v528 = vmax.f32 %v480, 0.0
    %v529 = vmax.f32 %v485, 0.0
    %v530 = vmax.f32 %v488, 0.0
    %v531 = vmax.f32 %v493, 0.0
    %v532 = vmax.f32 %v496, 0.0
    %v533 = vmax.f32 %v501, 0.0
    %v534 = vmax.f32 %v504, 0.0
    %v535 = vmax.f32 %v509, 0.0
    %v536 = vmax.f32 %v512, 0.0
    %v537 = vmax.f32 %v517, 0.0
    %v538 = vmax.f32 %v520, 0.0
    %v539 = vpack.c.bf16 %v524, %v523
    %v540 = vpack.c.bf16 %v526, %v525
    %v541 = vpack.c.bf16 %v528, %v527
    %v542 = vpack.c.bf16 %v530, %v529
    %v543 = vpack.c.bf16 %v532, %v531
    %v544 = vpack.c.bf16 %v534, %v533
    %v545 = vpack.c.bf16 %v536, %v535
    %v546 = vpack.c.bf16 %v538, %v537
    %v547 = vld [vmem:[#allocation8] sm:$0xf]
    %v548 = vld [vmem:[#allocation8 + $0x4] sm:$0xf]
    %v549 = vld [vmem:[#allocation8 + $0x8] sm:$0xf]
    %v550 = vld [vmem:[#allocation8 + $0xc] sm:$0xf]
    %v551 = vld [vmem:[#allocation8 + $0x10] sm:$0xf]
    %v552 = vld [vmem:[#allocation8 + $0x14] sm:$0xf]
    %v553 = vld [vmem:[#allocation8 + $0x18] sm:$0xf]
    %v554 = vld [vmem:[#allocation8 + $0x1c] sm:$0xf]
    %v555 = vld [vmem:[#allocation8 + $0x20] sm:$0xf]
    %v556 = vld [vmem:[#allocation8 + $0x24] sm:$0xf]
    %v557 = vld [vmem:[#allocation8 + $0x28] sm:$0xf]
    %v558 = vld [vmem:[#allocation8 + $0x2c] sm:$0xf]
    %v559 = vld [vmem:[#allocation8 + $0x30] sm:$0xf]
    %v560 = vld [vmem:[#allocation8 + $0x34] sm:$0xf]
    %v561 = vld [vmem:[#allocation8 + $0x38] sm:$0xf]
    %v562 = vld [vmem:[#allocation8 + $0x3c] sm:$0xf]
    %v579 = vunpack.c.l.b16 %v547
    %v580 = vunpack.c.l.b16 %v548
    %v581 = vunpack.c.l.b16 %v549
    %v582 = vunpack.c.l.b16 %v550
    %v583 = vunpack.c.l.b16 %v551
    %v584 = vunpack.c.l.b16 %v552
    %v585 = vunpack.c.l.b16 %v553
    %v586 = vunpack.c.l.b16 %v554
    %v587 = vunpack.c.l.b16 %v555
    %v588 = vunpack.c.l.b16 %v556
    %v589 = vunpack.c.l.b16 %v557
    %v590 = vunpack.c.l.b16 %v558
    %v591 = vunpack.c.l.b16 %v559
    %v592 = vunpack.c.l.b16 %v560
    %v593 = vunpack.c.l.b16 %v561
    %v594 = vunpack.c.l.b16 %v562
    %v595 = vpack.c.b16 %v580, %v579
    %v596 = vpack.c.b16 %v582, %v581
    %v597 = vpack.c.b16 %v584, %v583
    %v598 = vpack.c.b16 %v586, %v585
    %v599 = vpack.c.b16 %v588, %v587
    %v600 = vpack.c.b16 %v590, %v589
    %v601 = vpack.c.b16 %v592, %v591
    %v602 = vpack.c.b16 %v594, %v593
    %611 = vmatprep.subr.bf16.mxu0 0
    %612 = vmatpush1.bf16.msra.mxu0 %v602
    %613 = vmatprep.subr.bf16.mxu0 0
    %614 = vmatpush1.bf16.msra.mxu0 %v601
    %615 = vmatprep.subr.bf16.mxu0 0
    %616 = vmatpush1.bf16.msra.mxu0 %v600
    %617 = vmatprep.subr.bf16.mxu0 0
    %618 = vmatpush1.bf16.msra.mxu0 %v599
    %619 = vmatprep.subr.bf16.mxu0 0
    %620 = vmatpush1.bf16.msra.mxu0 %v598
    %621 = vmatprep.subr.bf16.mxu0 0
    %622 = vmatpush1.bf16.msra.mxu0 %v597
    %623 = vmatprep.subr.bf16.mxu0 0
    %624 = vmatpush1.bf16.msra.mxu0 %v596
    %625 = vmatprep.subr.bf16.mxu0 0
    %626 = vmatpush1.bf16.msra.mxu0 %v595
    %627 = vmatprep.subr.bf16.mxu0 0
    %628 = vmatpush2.bf16.msra.mxu0 0
    %629 = vmatprep.subr.bf16.mxu0 0
    %630 = vmatpush2.bf16.msra.mxu0 0
    %631 = vmatprep.subr.bf16.mxu0 0
    %632 = vmatpush2.bf16.msra.mxu0 0
    %633 = vmatprep.subr.bf16.mxu0 0
    %634 = vmatpush2.bf16.msra.mxu0 0
    %635 = vmatprep.subr.bf16.mxu0 0
    %636 = vmatpush2.bf16.msra.mxu0 0
    %637 = vmatprep.subr.bf16.mxu0 0
    %638 = vmatpush2.bf16.msra.mxu0 0
    %639 = vmatprep.subr.bf16.mxu0 0
    %640 = vmatpush2.bf16.msra.mxu0 0
    %641 = vmatprep.subr.bf16.mxu0 0
    %642 = vmatpush2.bf16.msra.mxu0 0
    %643 = vmatprep.mubr.bf16.mxu0 0
    %644 = vmatmul.mubr.bf16.gmra.mxu0 %v539
    %v645 = vpop.f32.mrf.mxu0
    %v646 = vadd.f32 0.0, %v645
    %v647 = vpop.f32.mrf.mxu0
    %v648 = vpop.f32.mrf.mxu0
    %v649 = vadd.f32 0.0, %v648
    %v650 = vpop.f32.mrf.mxu0
    %651 = vmatprep.mubr.bf16.mxu0 0
    %652 = vmatmul.mubr.bf16.gmra.mxu0 %v540
    %v653 = vpop.f32.mrf.mxu0
    %v654 = vadd.f32 0.0, %v653
    %v655 = vpop.f32.mrf.mxu0
    %v656 = vpop.f32.mrf.mxu0
    %v657 = vadd.f32 0.0, %v656
    %v658 = vpop.f32.mrf.mxu0
    %659 = vmatprep.mubr.bf16.mxu0 0
    %660 = vmatmul.mubr.bf16.gmra.mxu0 %v541
    %v661 = vpop.f32.mrf.mxu0
    %v662 = vadd.f32 0.0, %v661
    %v663 = vpop.f32.mrf.mxu0
    %v664 = vpop.f32.mrf.mxu0
    %v665 = vadd.f32 0.0, %v664
    %v666 = vpop.f32.mrf.mxu0
    %667 = vmatprep.mubr.bf16.mxu0 0
    %668 = vmatmul.mubr.bf16.gmra.mxu0 %v542
    %v669 = vpop.f32.mrf.mxu0
    %v670 = vadd.f32 0.0, %v669
    %v671 = vpop.f32.mrf.mxu0
    %v672 = vpop.f32.mrf.mxu0
    %v673 = vadd.f32 0.0, %v672
    %v674 = vpop.f32.mrf.mxu0
    %675 = vmatprep.mubr.bf16.mxu0 0
    %676 = vmatmul.mubr.bf16.gmra.mxu0 %v543
    %v677 = vpop.f32.mrf.mxu0
    %v678 = vadd.f32 0.0, %v677
    %v679 = vpop.f32.mrf.mxu0
    %v680 = vpop.f32.mrf.mxu0
    %v681 = vadd.f32 0.0, %v680
    %v682 = vpop.f32.mrf.mxu0
    %683 = vmatprep.mubr.bf16.mxu0 0
    %684 = vmatmul.mubr.bf16.gmra.mxu0 %v544
    %v685 = vpop.f32.mrf.mxu0
    %v686 = vadd.f32 0.0, %v685
    %v687 = vpop.f32.mrf.mxu0
    %v688 = vpop.f32.mrf.mxu0
    %v689 = vadd.f32 0.0, %v688
    %v690 = vpop.f32.mrf.mxu0
    %691 = vmatprep.mubr.bf16.mxu0 0
    %692 = vmatmul.mubr.bf16.gmra.mxu0 %v545
    %v693 = vpop.f32.mrf.mxu0
    %v694 = vadd.f32 0.0, %v693
    %v695 = vpop.f32.mrf.mxu0
    %v696 = vpop.f32.mrf.mxu0
    %v697 = vadd.f32 0.0, %v696
    %v698 = vpop.f32.mrf.mxu0
    %699 = vmatprep.mubr.bf16.mxu0 0
    %700 = vmatmul.mubr.bf16.gmra.mxu0 %v546
    %v701 = vpop.f32.mrf.mxu0
    %v702 = vadd.f32 0.0, %v701
    %v703 = vpop.f32.mrf.mxu0
    %v704 = vpop.f32.mrf.mxu0
    %v705 = vadd.f32 0.0, %v704
    %v706 = vpop.f32.mrf.mxu0
    %707 = vdwg.mxu0
    %v708 = vpack.c.bf16 %v649, %v646
    %v709 = vpack.c.bf16 %v657, %v654
    %v710 = vpack.c.bf16 %v665, %v662
    %v711 = vpack.c.bf16 %v673, %v670
    %v712 = vpack.c.bf16 %v681, %v678
    %v713 = vpack.c.bf16 %v689, %v686
    %v714 = vpack.c.bf16 %v697, %v694
    %v715 = vpack.c.bf16 %v705, %v702
    %v716 = vld [vmem:[%s5] sm:$0x1]
    %v718 = vlaneseq
    %v719 = vshrl.u32 %v718, 7
    %v720 = vsub.s32 0, %v719
    %v721 = vrot.slane %v716, %v720
    %723 = vmatprep.subr.bf16.mxu0 0
    %724 = vmatpush1.bf16.msra.mxu0 %v715
    %725 = vmatprep.subr.bf16.mxu0 0
    %726 = vmatpush1.bf16.msra.mxu0 %v714
    %727 = vmatprep.subr.bf16.mxu0 0
    %728 = vmatpush1.bf16.msra.mxu0 %v713
    %729 = vmatprep.subr.bf16.mxu0 0
    %730 = vmatpush1.bf16.msra.mxu0 %v712
    %731 = vmatprep.subr.bf16.mxu0 0
    %732 = vmatpush1.bf16.msra.mxu0 %v711
    %733 = vmatprep.subr.bf16.mxu0 0
    %734 = vmatpush1.bf16.msra.mxu0 %v710
    %735 = vmatprep.subr.bf16.mxu0 0
    %736 = vmatpush1.bf16.msra.mxu0 %v709
    %737 = vmatprep.subr.bf16.mxu0 0
    %738 = vmatpush1.bf16.msra.mxu0 %v708
    %739 = vmatprep.subr.bf16.mxu0 0
    %740 = vmatpush2.bf16.msra.mxu0 0
    %741 = vmatprep.subr.bf16.mxu0 0
    %742 = vmatpush2.bf16.msra.mxu0 0
    %743 = vmatprep.subr.bf16.mxu0 0
    %744 = vmatpush2.bf16.msra.mxu0 0
    %745 = vmatprep.subr.bf16.mxu0 0
    %746 = vmatpush2.bf16.msra.mxu0 0
    %747 = vmatprep.subr.bf16.mxu0 0
    %748 = vmatpush2.bf16.msra.mxu0 0
    %749 = vmatprep.subr.bf16.mxu0 0
    %750 = vmatpush2.bf16.msra.mxu0 0
    %751 = vmatprep.subr.bf16.mxu0 0
    %752 = vmatpush2.bf16.msra.mxu0 0
    %753 = vmatprep.subr.bf16.mxu0 0
    %754 = vmatpush2.bf16.msra.mxu0 0
    %755 = vmatprep.mubr.bf16.mxu0 0
    %756 = vmatmul.mubr.bf16.gmra.mxu0 %v410
    %v757 = vpop.f32.mrf.mxu0
    %v758 = vadd.f32 %v721, %v757
    %v759 = vpop.f32.mrf.mxu0
    %v760 = vpop.f32.mrf.mxu0
    %v761 = vadd.f32 %v721, %v760
    %v762 = vpop.f32.mrf.mxu0
    %763 = vmatprep.mubr.bf16.mxu0 0
    %764 = vmatmul.mubr.bf16.gmra.mxu0 %v411
    %v765 = vpop.f32.mrf.mxu0
    %v766 = vadd.f32 %v721, %v765
    %v767 = vpop.f32.mrf.mxu0
    %v768 = vpop.f32.mrf.mxu0
    %v769 = vadd.f32 %v721, %v768
    %v770 = vpop.f32.mrf.mxu0
    %771 = vmatprep.mubr.bf16.mxu0 0
    %772 = vmatmul.mubr.bf16.gmra.mxu0 %v412
    %v773 = vpop.f32.mrf.mxu0
    %v774 = vadd.f32 %v721, %v773
    %v775 = vpop.f32.mrf.mxu0
    %v776 = vpop.f32.mrf.mxu0
    %v777 = vadd.f32 %v721, %v776
    %v778 = vpop.f32.mrf.mxu0
    %779 = vmatprep.mubr.bf16.mxu0 0
    %780 = vmatmul.mubr.bf16.gmra.mxu0 %v413
    %v781 = vpop.f32.mrf.mxu0
    %v782 = vadd.f32 %v721, %v781
    %v783 = vpop.f32.mrf.mxu0
    %v784 = vpop.f32.mrf.mxu0
    %v785 = vadd.f32 %v721, %v784
    %v786 = vpop.f32.mrf.mxu0
    %787 = vmatprep.mubr.bf16.mxu0 0
    %788 = vmatmul.mubr.bf16.gmra.mxu0 %v414
    %v789 = vpop.f32.mrf.mxu0
    %v790 = vadd.f32 %v721, %v789
    %v791 = vpop.f32.mrf.mxu0
    %v792 = vpop.f32.mrf.mxu0
    %v793 = vadd.f32 %v721, %v792
    %v794 = vpop.f32.mrf.mxu0
    %795 = vmatprep.mubr.bf16.mxu0 0
    %796 = vmatmul.mubr.bf16.gmra.mxu0 %v415
    %v797 = vpop.f32.mrf.mxu0
    %v798 = vadd.f32 %v721, %v797
    %v799 = vpop.f32.mrf.mxu0
    %v800 = vpop.f32.mrf.mxu0
    %v801 = vadd.f32 %v721, %v800
    %v802 = vpop.f32.mrf.mxu0
    %803 = vmatprep.mubr.bf16.mxu0 0
    %804 = vmatmul.mubr.bf16.gmra.mxu0 %v416
    %v805 = vpop.f32.mrf.mxu0
    %v806 = vadd.f32 %v721, %v805
    %v807 = vpop.f32.mrf.mxu0
    %v808 = vpop.f32.mrf.mxu0
    %v809 = vadd.f32 %v721, %v808
    %v810 = vpop.f32.mrf.mxu0
    %811 = vmatprep.mubr.bf16.mxu0 0
    %812 = vmatmul.mubr.bf16.gmra.mxu0 %v417
    %v813 = vpop.f32.mrf.mxu0
    %v814 = vadd.f32 %v721, %v813
    %v815 = vpop.f32.mrf.mxu0
    %v816 = vpop.f32.mrf.mxu0
    %v817 = vadd.f32 %v721, %v816
    %v818 = vpop.f32.mrf.mxu0
    %819 = vdwg.mxu0
    %v820 = vmax.f32 %v758, 0.0
    %v821 = vmax.f32 %v761, 0.0
    %v822 = vmax.f32 %v766, 0.0
    %v823 = vmax.f32 %v769, 0.0
    %v824 = vmax.f32 %v774, 0.0
    %v825 = vmax.f32 %v777, 0.0
    %v826 = vmax.f32 %v782, 0.0
    %v827 = vmax.f32 %v785, 0.0
    %v828 = vmax.f32 %v790, 0.0
    %v829 = vmax.f32 %v793, 0.0
    %v830 = vmax.f32 %v798, 0.0
    %v831 = vmax.f32 %v801, 0.0
    %v832 = vmax.f32 %v806, 0.0
    %v833 = vmax.f32 %v809, 0.0
    %v834 = vmax.f32 %v814, 0.0
    %v835 = vmax.f32 %v817, 0.0
    %v836 = vpack.c.bf16 %v821, %v820
    %v837 = vpack.c.bf16 %v823, %v822
    %v838 = vpack.c.bf16 %v825, %v824
    %v839 = vpack.c.bf16 %v827, %v826
    %v840 = vpack.c.bf16 %v829, %v828
    %v841 = vpack.c.bf16 %v831, %v830
    %v842 = vpack.c.bf16 %v833, %v832
    %v843 = vpack.c.bf16 %v835, %v834
    %v844 = vld [vmem:[#allocation10] sm:$0xf]
    %v845 = vld [vmem:[#allocation10 + $0x4] sm:$0xf]
    %v846 = vld [vmem:[#allocation10 + $0x8] sm:$0xf]
    %v847 = vld [vmem:[#allocation10 + $0xc] sm:$0xf]
    %v848 = vld [vmem:[#allocation10 + $0x10] sm:$0xf]
    %v849 = vld [vmem:[#allocation10 + $0x14] sm:$0xf]
    %v850 = vld [vmem:[#allocation10 + $0x18] sm:$0xf]
    %v851 = vld [vmem:[#allocation10 + $0x1c] sm:$0xf]
    %v852 = vld [vmem:[#allocation10 + $0x20] sm:$0xf]
    %v853 = vld [vmem:[#allocation10 + $0x24] sm:$0xf]
    %v854 = vld [vmem:[#allocation10 + $0x28] sm:$0xf]
    %v855 = vld [vmem:[#allocation10 + $0x2c] sm:$0xf]
    %v856 = vld [vmem:[#allocation10 + $0x30] sm:$0xf]
    %v857 = vld [vmem:[#allocation10 + $0x34] sm:$0xf]
    %v858 = vld [vmem:[#allocation10 + $0x38] sm:$0xf]
    %v859 = vld [vmem:[#allocation10 + $0x3c] sm:$0xf]
    %v876 = vunpack.c.l.b16 %v844
    %v877 = vunpack.c.l.b16 %v845
    %v878 = vunpack.c.l.b16 %v846
    %v879 = vunpack.c.l.b16 %v847
    %v880 = vunpack.c.l.b16 %v848
    %v881 = vunpack.c.l.b16 %v849
    %v882 = vunpack.c.l.b16 %v850
    %v883 = vunpack.c.l.b16 %v851
    %v884 = vunpack.c.l.b16 %v852
    %v885 = vunpack.c.l.b16 %v853
    %v886 = vunpack.c.l.b16 %v854
    %v887 = vunpack.c.l.b16 %v855
    %v888 = vunpack.c.l.b16 %v856
    %v889 = vunpack.c.l.b16 %v857
    %v890 = vunpack.c.l.b16 %v858
    %v891 = vunpack.c.l.b16 %v859
    %v892 = vpack.c.b16 %v877, %v876
    %v893 = vpack.c.b16 %v879, %v878
    %v894 = vpack.c.b16 %v881, %v880
    %v895 = vpack.c.b16 %v883, %v882
    %v896 = vpack.c.b16 %v885, %v884
    %v897 = vpack.c.b16 %v887, %v886
    %v898 = vpack.c.b16 %v889, %v888
    %v899 = vpack.c.b16 %v891, %v890
    %908 = vmatprep.subr.bf16.mxu0 0
    %909 = vmatpush1.bf16.msra.mxu0 %v899
    %910 = vmatprep.subr.bf16.mxu0 0
    %911 = vmatpush1.bf16.msra.mxu0 %v898
    %912 = vmatprep.subr.bf16.mxu0 0
    %913 = vmatpush1.bf16.msra.mxu0 %v897
    %914 = vmatprep.subr.bf16.mxu0 0
    %915 = vmatpush1.bf16.msra.mxu0 %v896
    %916 = vmatprep.subr.bf16.mxu0 0
    %917 = vmatpush1.bf16.msra.mxu0 %v895
    %918 = vmatprep.subr.bf16.mxu0 0
    %919 = vmatpush1.bf16.msra.mxu0 %v894
    %920 = vmatprep.subr.bf16.mxu0 0
    %921 = vmatpush1.bf16.msra.mxu0 %v893
    %922 = vmatprep.subr.bf16.mxu0 0
    %923 = vmatpush1.bf16.msra.mxu0 %v892
    %924 = vmatprep.subr.bf16.mxu0 0
    %925 = vmatpush2.bf16.msra.mxu0 0
    %926 = vmatprep.subr.bf16.mxu0 0
    %927 = vmatpush2.bf16.msra.mxu0 0
    %928 = vmatprep.subr.bf16.mxu0 0
    %929 = vmatpush2.bf16.msra.mxu0 0
    %930 = vmatprep.subr.bf16.mxu0 0
    %931 = vmatpush2.bf16.msra.mxu0 0
    %932 = vmatprep.subr.bf16.mxu0 0
    %933 = vmatpush2.bf16.msra.mxu0 0
    %934 = vmatprep.subr.bf16.mxu0 0
    %935 = vmatpush2.bf16.msra.mxu0 0
    %936 = vmatprep.subr.bf16.mxu0 0
    %937 = vmatpush2.bf16.msra.mxu0 0
    %938 = vmatprep.subr.bf16.mxu0 0
    %939 = vmatpush2.bf16.msra.mxu0 0
    %940 = vmatprep.mubr.bf16.mxu0 0
    %941 = vmatmul.mubr.bf16.gmra.mxu0 %v836
    %v942 = vpop.f32.mrf.mxu0
    %v943 = vadd.f32 0.0, %v942
    %v944 = vpop.f32.mrf.mxu0
    %v945 = vpop.f32.mrf.mxu0
    %v946 = vadd.f32 0.0, %v945
    %v947 = vpop.f32.mrf.mxu0
    %948 = vmatprep.mubr.bf16.mxu0 0
    %949 = vmatmul.mubr.bf16.gmra.mxu0 %v837
    %v950 = vpop.f32.mrf.mxu0
    %v951 = vadd.f32 0.0, %v950
    %v952 = vpop.f32.mrf.mxu0
    %v953 = vpop.f32.mrf.mxu0
    %v954 = vadd.f32 0.0, %v953
    %v955 = vpop.f32.mrf.mxu0
    %956 = vmatprep.mubr.bf16.mxu0 0
    %957 = vmatmul.mubr.bf16.gmra.mxu0 %v838
    %v958 = vpop.f32.mrf.mxu0
    %v959 = vadd.f32 0.0, %v958
    %v960 = vpop.f32.mrf.mxu0
    %v961 = vpop.f32.mrf.mxu0
    %v962 = vadd.f32 0.0, %v961
    %v963 = vpop.f32.mrf.mxu0
    %964 = vmatprep.mubr.bf16.mxu0 0
    %965 = vmatmul.mubr.bf16.gmra.mxu0 %v839
    %v966 = vpop.f32.mrf.mxu0
    %v967 = vadd.f32 0.0, %v966
    %v968 = vpop.f32.mrf.mxu0
    %v969 = vpop.f32.mrf.mxu0
    %v970 = vadd.f32 0.0, %v969
    %v971 = vpop.f32.mrf.mxu0
    %972 = vmatprep.mubr.bf16.mxu0 0
    %973 = vmatmul.mubr.bf16.gmra.mxu0 %v840
    %v974 = vpop.f32.mrf.mxu0
    %v975 = vadd.f32 0.0, %v974
    %v976 = vpop.f32.mrf.mxu0
    %v977 = vpop.f32.mrf.mxu0
    %v978 = vadd.f32 0.0, %v977
    %v979 = vpop.f32.mrf.mxu0
    %980 = vmatprep.mubr.bf16.mxu0 0
    %981 = vmatmul.mubr.bf16.gmra.mxu0 %v841
    %v982 = vpop.f32.mrf.mxu0
    %v983 = vadd.f32 0.0, %v982
    %v984 = vpop.f32.mrf.mxu0
    %v985 = vpop.f32.mrf.mxu0
    %v986 = vadd.f32 0.0, %v985
    %v987 = vpop.f32.mrf.mxu0
    %988 = vmatprep.mubr.bf16.mxu0 0
    %989 = vmatmul.mubr.bf16.gmra.mxu0 %v842
    %v990 = vpop.f32.mrf.mxu0
    %v991 = vadd.f32 0.0, %v990
    %v992 = vpop.f32.mrf.mxu0
    %v993 = vpop.f32.mrf.mxu0
    %v994 = vadd.f32 0.0, %v993
    %v995 = vpop.f32.mrf.mxu0
    %996 = vmatprep.mubr.bf16.mxu0 0
    %997 = vmatmul.mubr.bf16.gmra.mxu0 %v843
    %v998 = vpop.f32.mrf.mxu0
    %v999 = vadd.f32 0.0, %v998
    %v1000 = vpop.f32.mrf.mxu0
    %v1001 = vpop.f32.mrf.mxu0
    %v1002 = vadd.f32 0.0, %v1001
    %v1003 = vpop.f32.mrf.mxu0
    %1004 = vdwg.mxu0
    %v1005 = vpack.c.bf16 %v946, %v943
    %v1006 = vpack.c.bf16 %v954, %v951
    %v1007 = vpack.c.bf16 %v962, %v959
    %v1008 = vpack.c.bf16 %v970, %v967
    %v1009 = vpack.c.bf16 %v978, %v975
    %v1010 = vpack.c.bf16 %v986, %v983
    %v1011 = vpack.c.bf16 %v994, %v991
    %v1012 = vpack.c.bf16 %v1002, %v999
    %v1013 = vld [vmem:[%s7] sm:$0x1]
    %v1015 = vlaneseq
    %v1016 = vshrl.u32 %v1015, 7
    %v1017 = vsub.s32 0, %v1016
    %v1018 = vrot.slane %v1013, %v1017
    %1020 = vmatprep.subr.bf16.mxu0 0
    %1021 = vmatpush1.bf16.msra.mxu0 %v1012
    %1022 = vmatprep.subr.bf16.mxu0 0
    %1023 = vmatpush1.bf16.msra.mxu0 %v1011
    %1024 = vmatprep.subr.bf16.mxu0 0
    %1025 = vmatpush1.bf16.msra.mxu0 %v1010
    %1026 = vmatprep.subr.bf16.mxu0 0
    %1027 = vmatpush1.bf16.msra.mxu0 %v1009
    %1028 = vmatprep.subr.bf16.mxu0 0
    %1029 = vmatpush1.bf16.msra.mxu0 %v1008
    %1030 = vmatprep.subr.bf16.mxu0 0
    %1031 = vmatpush1.bf16.msra.mxu0 %v1007
    %1032 = vmatprep.subr.bf16.mxu0 0
    %1033 = vmatpush1.bf16.msra.mxu0 %v1006
    %1034 = vmatprep.subr.bf16.mxu0 0
    %1035 = vmatpush1.bf16.msra.mxu0 %v1005
    %1036 = vmatprep.subr.bf16.mxu0 0
    %1037 = vmatpush2.bf16.msra.mxu0 0
    %1038 = vmatprep.subr.bf16.mxu0 0
    %1039 = vmatpush2.bf16.msra.mxu0 0
    %1040 = vmatprep.subr.bf16.mxu0 0
    %1041 = vmatpush2.bf16.msra.mxu0 0
    %1042 = vmatprep.subr.bf16.mxu0 0
    %1043 = vmatpush2.bf16.msra.mxu0 0
    %1044 = vmatprep.subr.bf16.mxu0 0
    %1045 = vmatpush2.bf16.msra.mxu0 0
    %1046 = vmatprep.subr.bf16.mxu0 0
    %1047 = vmatpush2.bf16.msra.mxu0 0
    %1048 = vmatprep.subr.bf16.mxu0 0
    %1049 = vmatpush2.bf16.msra.mxu0 0
    %1050 = vmatprep.subr.bf16.mxu0 0
    %1051 = vmatpush2.bf16.msra.mxu0 0
    %1052 = vmatprep.mubr.bf16.mxu0 0
    %1053 = vmatmul.mubr.bf16.gmra.mxu0 %v410
    %v1054 = vpop.f32.mrf.mxu0
    %v1055 = vadd.f32 %v1018, %v1054
    %v1056 = vpop.f32.mrf.mxu0
    %v1057 = vpop.f32.mrf.mxu0
    %v1058 = vadd.f32 %v1018, %v1057
    %v1059 = vpop.f32.mrf.mxu0
    %1060 = vmatprep.mubr.bf16.mxu0 0
    %1061 = vmatmul.mubr.bf16.gmra.mxu0 %v411
    %v1062 = vpop.f32.mrf.mxu0
    %v1063 = vadd.f32 %v1018, %v1062
    %v1064 = vpop.f32.mrf.mxu0
    %v1065 = vpop.f32.mrf.mxu0
    %v1066 = vadd.f32 %v1018, %v1065
    %v1067 = vpop.f32.mrf.mxu0
    %1068 = vmatprep.mubr.bf16.mxu0 0
    %1069 = vmatmul.mubr.bf16.gmra.mxu0 %v412
    %v1070 = vpop.f32.mrf.mxu0
    %v1071 = vadd.f32 %v1018, %v1070
    %v1072 = vpop.f32.mrf.mxu0
    %v1073 = vpop.f32.mrf.mxu0
    %v1074 = vadd.f32 %v1018, %v1073
    %v1075 = vpop.f32.mrf.mxu0
    %1076 = vmatprep.mubr.bf16.mxu0 0
    %1077 = vmatmul.mubr.bf16.gmra.mxu0 %v413
    %v1078 = vpop.f32.mrf.mxu0
    %v1079 = vadd.f32 %v1018, %v1078
    %v1080 = vpop.f32.mrf.mxu0
    %v1081 = vpop.f32.mrf.mxu0
    %v1082 = vadd.f32 %v1018, %v1081
    %v1083 = vpop.f32.mrf.mxu0
    %1084 = vmatprep.mubr.bf16.mxu0 0
    %1085 = vmatmul.mubr.bf16.gmra.mxu0 %v414
    %v1086 = vpop.f32.mrf.mxu0
    %v1087 = vadd.f32 %v1018, %v1086
    %v1088 = vpop.f32.mrf.mxu0
    %v1089 = vpop.f32.mrf.mxu0
    %v1090 = vadd.f32 %v1018, %v1089
    %v1091 = vpop.f32.mrf.mxu0
    %1092 = vmatprep.mubr.bf16.mxu0 0
    %1093 = vmatmul.mubr.bf16.gmra.mxu0 %v415
    %v1094 = vpop.f32.mrf.mxu0
    %v1095 = vadd.f32 %v1018, %v1094
    %v1096 = vpop.f32.mrf.mxu0
    %v1097 = vpop.f32.mrf.mxu0
    %v1098 = vadd.f32 %v1018, %v1097
    %v1099 = vpop.f32.mrf.mxu0
    %1100 = vmatprep.mubr.bf16.mxu0 0
    %1101 = vmatmul.mubr.bf16.gmra.mxu0 %v416
    %v1102 = vpop.f32.mrf.mxu0
    %v1103 = vadd.f32 %v1018, %v1102
    %v1104 = vpop.f32.mrf.mxu0
    %v1105 = vpop.f32.mrf.mxu0
    %v1106 = vadd.f32 %v1018, %v1105
    %v1107 = vpop.f32.mrf.mxu0
    %1108 = vmatprep.mubr.bf16.mxu0 0
    %1109 = vmatmul.mubr.bf16.gmra.mxu0 %v417
    %v1110 = vpop.f32.mrf.mxu0
    %v1111 = vadd.f32 %v1018, %v1110
    %v1112 = vpop.f32.mrf.mxu0
    %v1113 = vpop.f32.mrf.mxu0
    %v1114 = vadd.f32 %v1018, %v1113
    %v1115 = vpop.f32.mrf.mxu0
    %1116 = vdwg.mxu0
    %v1117 = vld [vmem:[%s8] sm:$0xf]
    %v1118 = vpack.c.bf16 %v1058, %v1055
    %v1119 = vpack.c.bf16 %v1066, %v1063
    %v1120 = vpack.c.bf16 %v1074, %v1071
    %v1121 = vpack.c.bf16 %v1082, %v1079
    %v1122 = vpack.c.bf16 %v1090, %v1087
    %v1123 = vpack.c.bf16 %v1098, %v1095
    %v1124 = vpack.c.bf16 %v1106, %v1103
    %v1125 = vpack.c.bf16 %v1114, %v1111
    %1126 = vmatprep.subr.bf16.mxu0 0
    %1127 = vmatpush1.bf16.msra.mxu0 %v1125
    %1128 = vmatprep.subr.bf16.mxu0 0
    %1129 = vmatpush1.bf16.msra.mxu0 %v1124
    %1130 = vmatprep.subr.bf16.mxu0 0
    %1131 = vmatpush1.bf16.msra.mxu0 %v1123
    %1132 = vmatprep.subr.bf16.mxu0 0
    %1133 = vmatpush1.bf16.msra.mxu0 %v1122
    %1134 = vmatprep.subr.bf16.mxu0 0
    %1135 = vmatpush1.bf16.msra.mxu0 %v1121
    %1136 = vmatprep.subr.bf16.mxu0 0
    %1137 = vmatpush1.bf16.msra.mxu0 %v1120
    %1138 = vmatprep.subr.bf16.mxu0 0
    %1139 = vmatpush1.bf16.msra.mxu0 %v1119
    %1140 = vmatprep.subr.bf16.mxu0 0
    %1141 = vmatpush1.bf16.msra.mxu0 %v1118
    %1142 = vmatprep.subr.bf16.mxu0 0
    %1143 = vmatpush2.bf16.msra.mxu0 0
    %1144 = vmatprep.subr.bf16.mxu0 0
    %1145 = vmatpush2.bf16.msra.mxu0 0
    %1146 = vmatprep.subr.bf16.mxu0 0
    %1147 = vmatpush2.bf16.msra.mxu0 0
    %1148 = vmatprep.subr.bf16.mxu0 0
    %1149 = vmatpush2.bf16.msra.mxu0 0
    %1150 = vmatprep.subr.bf16.mxu0 0
    %1151 = vmatpush2.bf16.msra.mxu0 0
    %1152 = vmatprep.subr.bf16.mxu0 0
    %1153 = vmatpush2.bf16.msra.mxu0 0
    %1154 = vmatprep.subr.bf16.mxu0 0
    %1155 = vmatpush2.bf16.msra.mxu0 0
    %1156 = vmatprep.subr.bf16.mxu0 0
    %1157 = vmatpush2.bf16.msra.mxu0 0
    %1158 = vmatprep.mubr.bf16.mxu0 0
    %1159 = vmatmul.mubr.bf16.gmra.mxu0 %v1117
    %v1160 = vpop.f32.mrf.mxu0
    %v1161 = vadd.f32 0.0, %v1160
    %v1162 = vpop.f32.mrf.mxu0
    %v1163 = vpop.f32.mrf.mxu0
    %v1164 = vpop.f32.mrf.mxu0
    %1165 = vdwg.mxu0
    %v1166 = vpack.c.bf16 %v1161, %v1161
    %v1167 = vld [vmem:[#allocation11] sm:$0xf]
    %v1168 = vld [vmem:[#allocation11 + $0x4] sm:$0xf]
    %v1169 = vld [vmem:[#allocation11 + $0x8] sm:$0xf]
    %v1170 = vld [vmem:[#allocation11 + $0xc] sm:$0xf]
    %v1171 = vld [vmem:[#allocation11 + $0x10] sm:$0xf]
    %v1172 = vld [vmem:[#allocation11 + $0x14] sm:$0xf]
    %v1173 = vld [vmem:[#allocation11 + $0x18] sm:$0xf]
    %v1174 = vld [vmem:[#allocation11 + $0x1c] sm:$0xf]
    %v1175 = vld [vmem:[#allocation11 + $0x20] sm:$0xf]
    %v1176 = vld [vmem:[#allocation11 + $0x24] sm:$0xf]
    %v1177 = vld [vmem:[#allocation11 + $0x28] sm:$0xf]
    %v1178 = vld [vmem:[#allocation11 + $0x2c] sm:$0xf]
    %v1179 = vld [vmem:[#allocation11 + $0x30] sm:$0xf]
    %v1180 = vld [vmem:[#allocation11 + $0x34] sm:$0xf]
    %v1181 = vld [vmem:[#allocation11 + $0x38] sm:$0xf]
    %v1182 = vld [vmem:[#allocation11 + $0x3c] sm:$0xf]
    %v1183 = vld [vmem:[%s10] sm:$0x1]
    %v1185 = vlaneseq
    %v1186 = vshrl.u32 %v1185, 7
    %v1187 = vsub.s32 0, %v1186
    %v1188 = vrot.slane %v1183, %v1187
    %v1206 = vunpack.c.l.b16 %v1167
    %v1207 = vunpack.c.l.b16 %v1168
    %v1208 = vunpack.c.l.b16 %v1169
    %v1209 = vunpack.c.l.b16 %v1170
    %v1210 = vunpack.c.l.b16 %v1171
    %v1211 = vunpack.c.l.b16 %v1172
    %v1212 = vunpack.c.l.b16 %v1173
    %v1213 = vunpack.c.l.b16 %v1174
    %v1214 = vunpack.c.l.b16 %v1175
    %v1215 = vunpack.c.l.b16 %v1176
    %v1216 = vunpack.c.l.b16 %v1177
    %v1217 = vunpack.c.l.b16 %v1178
    %v1218 = vunpack.c.l.b16 %v1179
    %v1219 = vunpack.c.l.b16 %v1180
    %v1220 = vunpack.c.l.b16 %v1181
    %v1221 = vunpack.c.l.b16 %v1182
    %v1222 = vpack.c.b16 %v1207, %v1206
    %v1223 = vpack.c.b16 %v1209, %v1208
    %v1224 = vpack.c.b16 %v1211, %v1210
    %v1225 = vpack.c.b16 %v1213, %v1212
    %v1226 = vpack.c.b16 %v1215, %v1214
    %v1227 = vpack.c.b16 %v1217, %v1216
    %v1228 = vpack.c.b16 %v1219, %v1218
    %v1229 = vpack.c.b16 %v1221, %v1220
    %1238 = vmatprep.subr.bf16.mxu0 0
    %1239 = vmatpush1.bf16.msra.mxu0 %v1229
    %1240 = vmatprep.subr.bf16.mxu0 0
    %1241 = vmatpush1.bf16.msra.mxu0 %v1228
    %1242 = vmatprep.subr.bf16.mxu0 0
    %1243 = vmatpush1.bf16.msra.mxu0 %v1227
    %1244 = vmatprep.subr.bf16.mxu0 0
    %1245 = vmatpush1.bf16.msra.mxu0 %v1226
    %1246 = vmatprep.subr.bf16.mxu0 0
    %1247 = vmatpush1.bf16.msra.mxu0 %v1225
    %1248 = vmatprep.subr.bf16.mxu0 0
    %1249 = vmatpush1.bf16.msra.mxu0 %v1224
    %1250 = vmatprep.subr.bf16.mxu0 0
    %1251 = vmatpush1.bf16.msra.mxu0 %v1223
    %1252 = vmatprep.subr.bf16.mxu0 0
    %1253 = vmatpush1.bf16.msra.mxu0 %v1222
    %1254 = vmatprep.subr.bf16.mxu0 0
    %1255 = vmatpush2.bf16.msra.mxu0 0
    %1256 = vmatprep.subr.bf16.mxu0 0
    %1257 = vmatpush2.bf16.msra.mxu0 0
    %1258 = vmatprep.subr.bf16.mxu0 0
    %1259 = vmatpush2.bf16.msra.mxu0 0
    %1260 = vmatprep.subr.bf16.mxu0 0
    %1261 = vmatpush2.bf16.msra.mxu0 0
    %1262 = vmatprep.subr.bf16.mxu0 0
    %1263 = vmatpush2.bf16.msra.mxu0 0
    %1264 = vmatprep.subr.bf16.mxu0 0
    %1265 = vmatpush2.bf16.msra.mxu0 0
    %1266 = vmatprep.subr.bf16.mxu0 0
    %1267 = vmatpush2.bf16.msra.mxu0 0
    %1268 = vmatprep.subr.bf16.mxu0 0
    %1269 = vmatpush2.bf16.msra.mxu0 0
    %1270 = vmatprep.mubr.bf16.mxu0 0
    %1271 = vmatmul.mubr.bf16.gmra.mxu0 %v1166
    %v1272 = vpop.f32.mrf.mxu0
    %v1273 = vadd.f32 %v1188, %v1272
    %v1274 = vpop.f32.mrf.mxu0
    %v1275 = vpop.f32.mrf.mxu0
    %v1276 = vpop.f32.mrf.mxu0
    %1277 = vdwg.mxu0
    %1278 = vst [vmem:[#allocation13] sm:$0xff] %v1273
    // Predicated region
    $region70: #{tpu_custom_call.1} parent=1 // pred_check
      _
    $region71: #{tpu_custom_call.1} parent=1 // pred_check_branch
      %1280 = sbr.rel (0) target = $region73
    $region72: #{tpu_custom_call.1} parent=1 // pred_region
      %s1282 = ssub.s32 128, 128
      %1283 = vsyncadd [#allocation4], %s1282
      %s1285 = sshll.u32 [#allocation13], 4
      %s1286 = int_to_ptr.vmem [resolvable:$true] %s1285
      %1288 = dma.vmem_to_hbm [thread:$0]  %s1286, 128, %s11, [#allocation4]
    $region73: #{tpu_custom_call.1} parent=1 // pred_fallthru
      _
    // Predicated region
    $region74: #{tpu_custom_call.1} parent=1 // pred_check
      _
    $region75: #{tpu_custom_call.1} parent=1 // pred_check_branch
      %1290 = sbr.rel (0) target = $region77
    $region76: #{tpu_custom_call.1} parent=1 // pred_region
      %1291 = dma.done [#allocation4], 128
    $region77: #{tpu_custom_call.1} parent=1 // pred_fallthru
      _
    %1292 = vsyncpa [#allocation3], 1
    %1293 = vsyncpa [#allocation6], 1
    %1294 = vsyncpa [#allocation9], 1
    %1295 = vsyncpa [#allocation12], 1
    %1296 = vsyncpa [#allocation4], 1

</llo_original>
